<compile_context>
chip_gen: v6e
topology: v6e:2x2x1
jax: 0.10.0
libtpu: 0.0.40
codegen_flags: <defaults>
</compile_context>

<pallas_src>
import functools

import jax
import jax.numpy as jnp
from jax import lax
from jax.experimental import pallas as pl
from jax.experimental.pallas import tpu as pltpu

_LANE = 128
_SUBLANE = 8


def _soft_dice_kernel(logits_ref, targets_ref, out_ref, inter_acc, card_acc, *,
                      num_classes, binary, tile_rows, chunk_rows, nk_inner, num_k,
                      needs_mask, full_rows, rem_lanes):
    # logits_ref : (C,  tile_rows, 128)  current (batch, spatial-tile) block
    # targets_ref: (Ct, tile_rows, 128)  Ct = 1 (binary) or C
    # out_ref    : (8, 128)   row 0 = per-channel intersection, row 1 = cardinality
    # inter_acc / card_acc: (C, chunk_rows, 128) f32 accumulators across k steps
    C = num_classes
    k = pl.program_id(2)
    n_chunks = -(-tile_rows // chunk_rows)
    global_tile = pl.program_id(0) * nk_inner + k

    @pl.when(k == 0)
    def _init():
        inter_acc[...] = jnp.zeros_like(inter_acc)
        card_acc[...] = jnp.zeros_like(card_acc)

    def step(masked):
        # Walk the tile in small row chunks; everything stays in vregs, the loop
        # carry holds the per-channel partial sums.
        def body(i, carry):
            inter_p, card_p = carry
            r0 = pl.multiple_of(i * chunk_rows, chunk_rows)
            x = [logits_ref[c, pl.ds(r0, chunk_rows), :].astype(jnp.float32)
                 for c in range(C)]
            if masked:
                # Overflow-proof validity test: compare row / lane separately
                # instead of forming the flat index (no *128 multiply).
                row_in = lax.broadcasted_iota(jnp.int32, (chunk_rows, _LANE), 0)
                lane_in = lax.broadcasted_iota(jnp.int32, (chunk_rows, _LANE), 1)
                grow = global_tile * tile_rows + r0 + row_in
                valid = (grow < full_rows) | ((grow == full_rows) & (lane_in < rem_lanes))
                valid_f = valid.astype(jnp.float32)
                # Clamp potentially-garbage out-of-bounds data before max/exp.
                x = [jnp.where(valid, xc, 0.0) for xc in x]
            m = x[0]
            for c in range(1, C):
                m = jnp.maximum(m, x[c])
            e = [jnp.exp(xc - m) for xc in x]                  # EUP
            denom = e[0]
            for c in range(1, C):
                denom = denom + e[c]
            inv = pl.reciprocal(denom, approx=True)            # EUP slot
            inv = inv * (2.0 - denom * inv)                    # Newton -> ~f32 accuracy
            if masked:
                inv = inv * valid_f                            # zero invalid probs
            if binary:
                t1 = targets_ref[0, pl.ds(r0, chunk_rows), :].astype(jnp.float32)
                if masked:
                    t1 = jnp.where(valid, t1, 0.0)
                    t0 = valid_f - t1                          # synth background channel
                else:
                    t0 = 1.0 - t1
                t = [t0, t1]
            else:
                t = [targets_ref[c, pl.ds(r0, chunk_rows), :].astype(jnp.float32)
                     for c in range(C)]
                if masked:
                    t = [jnp.where(valid, tc, 0.0) for tc in t]
            new_inter, new_card = [], []
            for c in range(C):
                p_c = e[c] * inv
                new_inter.append(inter_p[c] + p_c * t[c])
                new_card.append(card_p[c] + p_c + t[c])
            return tuple(new_inter), tuple(new_card)

        zero = tuple(jnp.zeros((chunk_rows, _LANE), jnp.float32) for _ in range(C))
        inter_p, card_p = lax.fori_loop(0, n_chunks, body, (zero, zero),
                                        unroll=n_chunks <= 8)
        for c in range(C):
            inter_acc[c] += inter_p[c]
            card_acc[c] += card_p[c]

    if needs_mask:
        # Only the globally-last spatial tile can contain padded / out-of-bounds
        # positions; every other tile runs the mask-free hot path.
        is_tail = global_tile == num_k - 1
        pl.when(is_tail)(lambda: step(True))
        pl.when(jnp.logical_not(is_tail))(lambda: step(False))
    else:
        step(False)

    @pl.when(k == nk_inner - 1)
    def _finalize():
        lane_pos = lax.broadcasted_iota(jnp.int32, (1, _LANE), 1)
        row_inter = jnp.zeros((1, _LANE), jnp.float32)
        row_card = jnp.zeros((1, _LANE), jnp.float32)
        for c in range(C):
            row_inter = jnp.where(lane_pos == c, jnp.sum(inter_acc[c]), row_inter)
            row_card = jnp.where(lane_pos == c, jnp.sum(card_acc[c]), row_card)
        sub_pos = lax.broadcasted_iota(jnp.int32, (_SUBLANE, _LANE), 0)
        out_ref[...] = jnp.where(sub_pos == 0, row_inter,
                                 jnp.where(sub_pos == 1, row_card, 0.0))


def _round_up(x, m):
    return ((x + m - 1) // m) * m


def soft_dice_loss(logits, targets, smooth=1.0, *, max_tile_rows=2048,
                   downcast_targets=True):
    """Pallas implementation of SoftDiceLoss.forward (returns the scalar loss)."""
    B, C = logits.shape[0], logits.shape[1]
    binary = targets.shape[1] == 1
    if binary and C != 2:
        raise ValueError("single-channel targets require 2-channel logits")
    if (not binary) and targets.shape[1] != C:
        raise ValueError("targets channel dim must match logits channel dim")

    HW = 1
    for d in logits.shape[2:]:
        HW *= d
    Ct = 1 if binary else C

    logits_f = logits.reshape(B, C, HW)
    targets_f = targets.reshape(B, Ct, HW)
    if downcast_targets and targets_f.dtype == jnp.float32:
        # 0/1 one-hot / binary masks are exact in bf16; halves target HBM traffic.
        # Pass downcast_targets=False for non-{0,1} soft labels.
        targets_f = targets_f.astype(jnp.bfloat16)

    rem = HW % _LANE
    if rem:
        # TODO(synk): stream the <128-element lane tail via a manual DMA instead of
        # this jnp.pad copy (only hit when H*W is not a multiple of 128).
        pad = _LANE - rem
        logits_f = jnp.pad(logits_f, ((0, 0), (0, 0), (0, pad)))
        targets_f = jnp.pad(targets_f, ((0, 0), (0, 0), (0, pad)))
    total_rows = -(-HW // _LANE)
    # Free reshapes (trailing split of the contiguous last dim) — no HBM copy.
    logits_r = logits_f.reshape(B, C, total_rows, _LANE)
    targets_r = targets_f.reshape(B, Ct, total_rows, _LANE)

    # Tile sizing: ~4 MiB f32 logits block; 2x double-buffered inputs + the tiny
    # (C, 8, 128) scratch stay well under the 32 MiB scoped-VMEM limit everywhere.
    cap = max(_SUBLANE, min(max_tile_rows, ((8192 // max(C, 2)) // _SUBLANE) * _SUBLANE))
    num_k = max(1, -(-total_rows // cap))
    if num_k == 1:
        tile_rows = total_rows          # == full dim: no 8-row divisibility needed
    else:
        tile_rows = _round_up(-(-total_rows // num_k), _SUBLANE)
        num_k = -(-total_rows // tile_rows)   # re-derive: last tile never fully empty
    chunk_rows = min(_SUBLANE, tile_rows)
    n_chunks = -(-tile_rows // chunk_rows)
    # Does the last tile read any position past the HW real elements?
    needs_mask = ((num_k - 1) * tile_rows + n_chunks * chunk_rows) * _LANE != HW

    # When B == 1 the batch axis cannot feed both v7x TensorCores; split the spatial
    # range into two parallel halves instead (partials are summed in the epilogue).
    nsplit = 2 if (B == 1 and num_k >= 2 and num_k % 2 == 0) else 1
    nk_inner = num_k // nsplit

    kernel = functools.partial(
        _soft_dice_kernel, num_classes=C, binary=binary, tile_rows=tile_rows,
        chunk_rows=chunk_rows, nk_inner=nk_inner, num_k=num_k,
        needs_mask=needs_mask, full_rows=HW // _LANE, rem_lanes=rem)

    parts = pl.pallas_call(
        kernel,
        out_shape=jax.ShapeDtypeStruct((nsplit, B, _SUBLANE, _LANE), jnp.float32),
        grid_spec=pltpu.PrefetchScalarGridSpec(
            num_scalar_prefetch=0,
            grid=(nsplit, B, nk_inner),            # spatial reduction axis last
            in_specs=[
                pl.BlockSpec((None, C, tile_rows, _LANE),
                             lambda s, b, k: (b, 0, s * nk_inner + k, 0)),
                pl.BlockSpec((None, Ct, tile_rows, _LANE),
                             lambda s, b, k: (b, 0, s * nk_inner + k, 0)),
            ],
            # Disjoint per (split, batch) output block -> both leading axes can be
            # "parallel"; full (8,128) tile -> unmasked store.
            out_specs=pl.BlockSpec((None, None, _SUBLANE, _LANE),
                                   lambda s, b, k: (s, b, 0, 0)),
            scratch_shapes=[
                pltpu.VMEM((C, chunk_rows, _LANE), jnp.float32),
                pltpu.VMEM((C, chunk_rows, _LANE), jnp.float32),
            ],
        ),
        compiler_params=pltpu.CompilerParams(
            dimension_semantics=("parallel", "parallel", "arbitrary"),
            vmem_limit_bytes=32 * 1024 * 1024,
        ),
    )(logits_r, targets_r)

    inter = jnp.sum(parts[:, :, 0, :C], axis=0)    # (B, C)
    card = jnp.sum(parts[:, :, 1, :C], axis=0)     # (B, C)
    dice = (2.0 * inter + smooth) / (card + smooth)
    # Tiny scalar epilogue (dice + mean over B*C) stays in plain JAX.
    return 1.0 - jnp.mean(dice)


def soft_dice_loss_ref(logits, targets, smooth=1.0):
    """Pure-JAX reference matching the PyTorch module."""
    probs = jax.nn.softmax(logits, axis=1)
    if targets.shape[1] == 1:
        targets = jnp.concatenate([1.0 - targets, targets], axis=1)
    B, C = probs.shape[0], probs.shape[1]
    pf = probs.reshape(B, C, -1)
    tf = targets.reshape(B, C, -1).astype(pf.dtype)
    inter = jnp.sum(pf * tf, axis=-1)
    card = jnp.sum(pf, axis=-1) + jnp.sum(tf, axis=-1)
    dice = (2.0 * inter + smooth) / (card + smooth)
    return 1.0 - jnp.mean(dice)


if __name__ == "__main__":
    key = jax.random.PRNGKey(0)
    keys = jax.random.split(key, 10)

    def check(name, out, ref):
        assert jnp.allclose(out, ref, atol=1e-4, rtol=1e-4), (name, float(out), float(ref))

    # Case 1: multi-class (B, C, H, W) with one-hot targets, tiny spatial extent.
    B, C, H, W = 2, 4, 16, 16
    logits = jax.random.normal(keys[0], (B, C, H, W), dtype=jnp.float32)
    labels = jax.random.randint(keys[1], (B, H, W), 0, C)
    targets = jnp.transpose(jax.nn.one_hot(labels, C, dtype=jnp.float32), (0, 3, 1, 2))
    out = jax.block_until_ready(soft_dice_loss(logits, targets))
    check("multiclass_small", out, soft_dice_loss_ref(logits, targets))

    # Case 2: binary path — single-channel targets, 2-channel logits.
    logits2 = jax.random.normal(keys[2], (B, 2, H, W), dtype=jnp.float32)
    targets2 = (jax.random.uniform(keys[3], (B, 1, H, W)) > 0.5).astype(jnp.float32)
    out2 = jax.block_until_ready(soft_dice_loss(logits2, targets2))
    check("binary", out2, soft_dice_loss_ref(logits2, targets2))

    # Case 3: C=3, 64x64 — single spatial tile, mask-free hot path.
    B3, C3, H3, W3 = 2, 3, 64, 64
    logits3 = jax.random.normal(keys[4], (B3, C3, H3, W3), dtype=jnp.float32)
    labels3 = jax.random.randint(keys[5], (B3, H3, W3), 0, C3)
    targets3 = jnp.transpose(jax.nn.one_hot(labels3, C3, dtype=jnp.float32), (0, 3, 1, 2))
    ref3 = soft_dice_loss_ref(logits3, targets3)
    out3 = jax.block_until_ready(soft_dice_loss(logits3, targets3))
    check("multiclass_1tile", out3, ref3)

    # Case 4: same inputs, forced multi-tile accumulation over the "arbitrary" axis.
    out4 = jax.block_until_ready(soft_dice_loss(logits3, targets3, max_tile_rows=8))
    check("multiclass_multitile", out4, ref3)

    # Case 5: B=1 -> leading size-2 parallel spatial split (dual-core path on v7x).
    logits5 = jax.random.normal(keys[6], (1, 4, 64, 64), dtype=jnp.float32)
    labels5 = jax.random.randint(keys[7], (1, 64, 64), 0, 4)
    targets5 = jnp.transpose(jax.nn.one_hot(labels5, 4, dtype=jnp.float32), (0, 3, 1, 2))
    out5 = jax.block_until_ready(soft_dice_loss(logits5, targets5, max_tile_rows=16))
    check("batch1_split", out5, soft_dice_loss_ref(logits5, targets5))

    # Case 6: H*W not a multiple of 128 -> lane-tail masking (pad-to-128 fallback).
    B6, C6, H6, W6 = 2, 3, 10, 10
    logits6 = jax.random.normal(keys[8], (B6, C6, H6, W6), dtype=jnp.float32)
    labels6 = jax.random.randint(keys[9], (B6, H6, W6), 0, C6)
    targets6 = jnp.transpose(jax.nn.one_hot(labels6, C6, dtype=jnp.float32), (0, 3, 1, 2))
    out6 = jax.block_until_ready(soft_dice_loss(logits6, targets6))
    check("lane_tail", out6, soft_dice_loss_ref(logits6, targets6))

    print("KERNEL_OK")
</pallas_src>

<mosaic_0001>
module attributes {stable_mosaic.version = 11 : i64} {
  func.func @_soft_dice_kernel(%arg0: i32, %arg1: i32, %arg2: i32, %arg3: memref<1x4x2x128xf32, #tpu.memory_space<vmem>>, %arg4: memref<1x4x2x128xbf16, #tpu.memory_space<vmem>>, %arg5: memref<1x1x8x128xf32, #tpu.memory_space<vmem>>, %arg6: memref<4x2x128xf32, #tpu.memory_space<vmem>>, %arg7: memref<4x2x128xf32, #tpu.memory_space<vmem>>) attributes {dimension_semantics = [#tpu.dimension_semantics<parallel>, #tpu.dimension_semantics<parallel>, #tpu.dimension_semantics<arbitrary>], iteration_bounds = array<i64: 1, 2, 1>, scalar_prefetch = 0 : i64, scratch_operands = 2 : i64, tpu.core_type = #tpu.core_type<tc>, window_params = [{transform_indices = @transform_0, window_bounds = array<i64: 1, 4, 2, 128>}, {transform_indices = @transform_1, window_bounds = array<i64: 1, 4, 2, 128>}, {transform_indices = @transform_2, window_bounds = array<i64: 1, 1, 8, 128>}]} {
    %c0_i32 = arith.constant 0 : i32
    %0 = arith.cmpi eq, %arg2, %c0_i32 : i32
    %1 = arith.extui %0 : i1 to i32
    %c0_i32_0 = arith.constant 0 : i32
    %2 = arith.cmpi ne, %1, %c0_i32_0 : i32
    scf.if %2 {
      %cst_76 = arith.constant 0.000000e+00 : f32
      %127 = vector.broadcast %cst_76 : f32 to vector<4x2x128xf32>
      %c0_77 = arith.constant 0 : index
      %c0_78 = arith.constant 0 : index
      %c0_79 = arith.constant 0 : index
      %128 = vector.load %arg6[%c0_77, %c0_78, %c0_79] : memref<4x2x128xf32, #tpu.memory_space<vmem>>, vector<4x2x128xf32>
      tpu.vector_store %arg6[%c0_77, %c0_78, %c0_79], %127 {strides = array<i32>} : memref<4x2x128xf32, #tpu.memory_space<vmem>>, vector<4x2x128xf32>,
      %cst_80 = arith.constant 0.000000e+00 : f32
      %129 = vector.broadcast %cst_80 : f32 to vector<4x2x128xf32>
      %c0_81 = arith.constant 0 : index
      %c0_82 = arith.constant 0 : index
      %c0_83 = arith.constant 0 : index
      %130 = vector.load %arg7[%c0_81, %c0_82, %c0_83] : memref<4x2x128xf32, #tpu.memory_space<vmem>>, vector<4x2x128xf32>
      tpu.vector_store %arg7[%c0_81, %c0_82, %c0_83], %129 {strides = array<i32>} : memref<4x2x128xf32, #tpu.memory_space<vmem>>, vector<4x2x128xf32>,
    } else {
    }
    %cst = arith.constant 0.000000e+00 : f32
    %3 = vector.broadcast %cst : f32 to vector<2x128xf32>
    %cst_1 = arith.constant 0.000000e+00 : f32
    %4 = vector.broadcast %cst_1 : f32 to vector<2x128xf32>
    %cst_2 = arith.constant 0.000000e+00 : f32
    %5 = vector.broadcast %cst_2 : f32 to vector<2x128xf32>
    %cst_3 = arith.constant 0.000000e+00 : f32
    %6 = vector.broadcast %cst_3 : f32 to vector<2x128xf32>
    %c0_i32_4 = arith.constant 0 : i32
    %c2_i32 = arith.constant 2 : i32
    %7 = arith.muli %c0_i32_4, %c2_i32 : i32
    %8 = tpu.assume_multiple %7, 2 : i32
    %c0 = arith.constant 0 : index
    %c0_5 = arith.constant 0 : index
    %9 = arith.index_cast %8 : i32 to index
    %c0_6 = arith.constant 0 : index
    %10 = vector.load %arg3[%c0, %c0_5, %9, %c0_6] : memref<1x4x2x128xf32, #tpu.memory_space<vmem>>, vector<1x1x2x128xf32>
    %11 = vector.shape_cast %10 : vector<1x1x2x128xf32> to vector<2x128xf32>
    %c0_7 = arith.constant 0 : index
    %c1 = arith.constant 1 : index
    %12 = arith.index_cast %8 : i32 to index
    %c0_8 = arith.constant 0 : index
    %13 = vector.load %arg3[%c0_7, %c1, %12, %c0_8] : memref<1x4x2x128xf32, #tpu.memory_space<vmem>>, vector<1x1x2x128xf32>
    %14 = vector.shape_cast %13 : vector<1x1x2x128xf32> to vector<2x128xf32>
    %c0_9 = arith.constant 0 : index
    %c2 = arith.constant 2 : index
    %15 = arith.index_cast %8 : i32 to index
    %c0_10 = arith.constant 0 : index
    %16 = vector.load %arg3[%c0_9, %c2, %15, %c0_10] : memref<1x4x2x128xf32, #tpu.memory_space<vmem>>, vector<1x1x2x128xf32>
    %17 = vector.shape_cast %16 : vector<1x1x2x128xf32> to vector<2x128xf32>
    %c0_11 = arith.constant 0 : index
    %c3 = arith.constant 3 : index
    %18 = arith.index_cast %8 : i32 to index
    %c0_12 = arith.constant 0 : index
    %19 = vector.load %arg3[%c0_11, %c3, %18, %c0_12] : memref<1x4x2x128xf32, #tpu.memory_space<vmem>>, vector<1x1x2x128xf32>
    %20 = vector.shape_cast %19 : vector<1x1x2x128xf32> to vector<2x128xf32>
    %21 = arith.maximumf %11, %14 : vector<2x128xf32>
    %22 = arith.maximumf %21, %17 : vector<2x128xf32>
    %23 = arith.maximumf %22, %20 : vector<2x128xf32>
    %24 = arith.subf %11, %23 : vector<2x128xf32>
    %25 = math.exp %24 : vector<2x128xf32>
    %26 = arith.subf %14, %23 : vector<2x128xf32>
    %27 = math.exp %26 : vector<2x128xf32>
    %28 = arith.subf %17, %23 : vector<2x128xf32>
    %29 = math.exp %28 : vector<2x128xf32>
    %30 = arith.subf %20, %23 : vector<2x128xf32>
    %31 = math.exp %30 : vector<2x128xf32>
    %32 = arith.addf %25, %27 : vector<2x128xf32>
    %33 = arith.addf %32, %29 : vector<2x128xf32>
    %34 = arith.addf %33, %31 : vector<2x128xf32>
    %35 = tpu.reciprocal %34 {approx = true} : vector<2x128xf32> -> vector<2x128xf32>
    %36 = arith.mulf %34, %35 : vector<2x128xf32>
    %cst_13 = arith.constant 2.000000e+00 : f32
    %37 = vector.broadcast %cst_13 : f32 to vector<2x128xf32>
    %38 = arith.subf %37, %36 : vector<2x128xf32>
    %39 = arith.mulf %35, %38 : vector<2x128xf32>
    %c0_14 = arith.constant 0 : index
    %c0_15 = arith.constant 0 : index
    %40 = arith.index_cast %8 : i32 to index
    %c0_16 = arith.constant 0 : index
    %41 = vector.load %arg4[%c0_14, %c0_15, %40, %c0_16] : memref<1x4x2x128xbf16, #tpu.memory_space<vmem>>, vector<1x1x2x128xbf16>
    %42 = vector.shape_cast %41 : vector<1x1x2x128xbf16> to vector<2x128xbf16>
    %43 = arith.extf %42 : vector<2x128xbf16> to vector<2x128xf32>
    %c0_17 = arith.constant 0 : index
    %c1_18 = arith.constant 1 : index
    %44 = arith.index_cast %8 : i32 to index
    %c0_19 = arith.constant 0 : index
    %45 = vector.load %arg4[%c0_17, %c1_18, %44, %c0_19] : memref<1x4x2x128xbf16, #tpu.memory_space<vmem>>, vector<1x1x2x128xbf16>
    %46 = vector.shape_cast %45 : vector<1x1x2x128xbf16> to vector<2x128xbf16>
    %47 = arith.extf %46 : vector<2x128xbf16> to vector<2x128xf32>
    %c0_20 = arith.constant 0 : index
    %c2_21 = arith.constant 2 : index
    %48 = arith.index_cast %8 : i32 to index
    %c0_22 = arith.constant 0 : index
    %49 = vector.load %arg4[%c0_20, %c2_21, %48, %c0_22] : memref<1x4x2x128xbf16, #tpu.memory_space<vmem>>, vector<1x1x2x128xbf16>
    %50 = vector.shape_cast %49 : vector<1x1x2x128xbf16> to vector<2x128xbf16>
    %51 = arith.extf %50 : vector<2x128xbf16> to vector<2x128xf32>
    %c0_23 = arith.constant 0 : index
    %c3_24 = arith.constant 3 : index
    %52 = arith.index_cast %8 : i32 to index
    %c0_25 = arith.constant 0 : index
    %53 = vector.load %arg4[%c0_23, %c3_24, %52, %c0_25] : memref<1x4x2x128xbf16, #tpu.memory_space<vmem>>, vector<1x1x2x128xbf16>
    %54 = vector.shape_cast %53 : vector<1x1x2x128xbf16> to vector<2x128xbf16>
    %55 = arith.extf %54 : vector<2x128xbf16> to vector<2x128xf32>
    %56 = arith.mulf %25, %39 : vector<2x128xf32>
    %57 = arith.mulf %56, %43 : vector<2x128xf32>
    %58 = arith.addf %3, %57 : vector<2x128xf32>
    %59 = arith.addf %3, %56 : vector<2x128xf32>
    %60 = arith.addf %59, %43 : vector<2x128xf32>
    %61 = arith.mulf %27, %39 : vector<2x128xf32>
    %62 = arith.mulf %61, %47 : vector<2x128xf32>
    %63 = arith.addf %4, %62 : vector<2x128xf32>
    %64 = arith.addf %4, %61 : vector<2x128xf32>
    %65 = arith.addf %64, %47 : vector<2x128xf32>
    %66 = arith.mulf %29, %39 : vector<2x128xf32>
    %67 = arith.mulf %66, %51 : vector<2x128xf32>
    %68 = arith.addf %5, %67 : vector<2x128xf32>
    %69 = arith.addf %5, %66 : vector<2x128xf32>
    %70 = arith.addf %69, %51 : vector<2x128xf32>
    %71 = arith.mulf %31, %39 : vector<2x128xf32>
    %72 = arith.mulf %71, %55 : vector<2x128xf32>
    %73 = arith.addf %6, %72 : vector<2x128xf32>
    %74 = arith.addf %6, %71 : vector<2x128xf32>
    %75 = arith.addf %74, %55 : vector<2x128xf32>
    %c1_i32 = arith.constant 1 : i32
    %c0_26 = arith.constant 0 : index
    %c0_27 = arith.constant 0 : index
    %c0_28 = arith.constant 0 : index
    %76 = vector.load %arg6[%c0_26, %c0_27, %c0_28] : memref<4x2x128xf32, #tpu.memory_space<vmem>>, vector<1x2x128xf32>
    %77 = vector.shape_cast %76 : vector<1x2x128xf32> to vector<2x128xf32>
    %78 = arith.addf %77, %58 : vector<2x128xf32>
    %c0_29 = arith.constant 0 : index
    %c0_30 = arith.constant 0 : index
    %c0_31 = arith.constant 0 : index
    %79 = vector.load %arg6[%c0_29, %c0_30, %c0_31] : memref<4x2x128xf32, #tpu.memory_space<vmem>>, vector<1x2x128xf32>
    %80 = vector.shape_cast %79 : vector<1x2x128xf32> to vector<2x128xf32>
    %81 = vector.shape_cast %78 : vector<2x128xf32> to vector<1x2x128xf32>
    tpu.vector_store %arg6[%c0_29, %c0_30, %c0_31], %81 {strides = array<i32>} : memref<4x2x128xf32, #tpu.memory_space<vmem>>, vector<1x2x128xf32>,
    %c0_32 = arith.constant 0 : index
    %c0_33 = arith.constant 0 : index
    %c0_34 = arith.constant 0 : index
    %82 = vector.load %arg7[%c0_32, %c0_33, %c0_34] : memref<4x2x128xf32, #tpu.memory_space<vmem>>, vector<1x2x128xf32>
    %83 = vector.shape_cast %82 : vector<1x2x128xf32> to vector<2x128xf32>
    %84 = arith.addf %83, %60 : vector<2x128xf32>
    %c0_35 = arith.constant 0 : index
    %c0_36 = arith.constant 0 : index
    %c0_37 = arith.constant 0 : index
    %85 = vector.load %arg7[%c0_35, %c0_36, %c0_37] : memref<4x2x128xf32, #tpu.memory_space<vmem>>, vector<1x2x128xf32>
    %86 = vector.shape_cast %85 : vector<1x2x128xf32> to vector<2x128xf32>
    %87 = vector.shape_cast %84 : vector<2x128xf32> to vector<1x2x128xf32>
    tpu.vector_store %arg7[%c0_35, %c0_36, %c0_37], %87 {strides = array<i32>} : memref<4x2x128xf32, #tpu.memory_space<vmem>>, vector<1x2x128xf32>,
    %c1_38 = arith.constant 1 : index
    %c0_39 = arith.constant 0 : index
    %c0_40 = arith.constant 0 : index
    %88 = vector.load %arg6[%c1_38, %c0_39, %c0_40] : memref<4x2x128xf32, #tpu.memory_space<vmem>>, vector<1x2x128xf32>
    %89 = vector.shape_cast %88 : vector<1x2x128xf32> to vector<2x128xf32>
    %90 = arith.addf %89, %63 : vector<2x128xf32>
    %c1_41 = arith.constant 1 : index
    %c0_42 = arith.constant 0 : index
    %c0_43 = arith.constant 0 : index
    %91 = vector.load %arg6[%c1_41, %c0_42, %c0_43] : memref<4x2x128xf32, #tpu.memory_space<vmem>>, vector<1x2x128xf32>
    %92 = vector.shape_cast %91 : vector<1x2x128xf32> to vector<2x128xf32>
    %93 = vector.shape_cast %90 : vector<2x128xf32> to vector<1x2x128xf32>
    tpu.vector_store %arg6[%c1_41, %c0_42, %c0_43], %93 {strides = array<i32>} : memref<4x2x128xf32, #tpu.memory_space<vmem>>, vector<1x2x128xf32>,
    %c1_44 = arith.constant 1 : index
    %c0_45 = arith.constant 0 : index
    %c0_46 = arith.constant 0 : index
    %94 = vector.load %arg7[%c1_44, %c0_45, %c0_46] : memref<4x2x128xf32, #tpu.memory_space<vmem>>, vector<1x2x128xf32>
    %95 = vector.shape_cast %94 : vector<1x2x128xf32> to vector<2x128xf32>
    %96 = arith.addf %95, %65 : vector<2x128xf32>
    %c1_47 = arith.constant 1 : index
    %c0_48 = arith.constant 0 : index
    %c0_49 = arith.constant 0 : index
    %97 = vector.load %arg7[%c1_47, %c0_48, %c0_49] : memref<4x2x128xf32, #tpu.memory_space<vmem>>, vector<1x2x128xf32>
    %98 = vector.shape_cast %97 : vector<1x2x128xf32> to vector<2x128xf32>
    %99 = vector.shape_cast %96 : vector<2x128xf32> to vector<1x2x128xf32>
    tpu.vector_store %arg7[%c1_47, %c0_48, %c0_49], %99 {strides = array<i32>} : memref<4x2x128xf32, #tpu.memory_space<vmem>>, vector<1x2x128xf32>,
    %c2_50 = arith.constant 2 : index
    %c0_51 = arith.constant 0 : index
    %c0_52 = arith.constant 0 : index
    %100 = vector.load %arg6[%c2_50, %c0_51, %c0_52] : memref<4x2x128xf32, #tpu.memory_space<vmem>>, vector<1x2x128xf32>
    %101 = vector.shape_cast %100 : vector<1x2x128xf32> to vector<2x128xf32>
    %102 = arith.addf %101, %68 : vector<2x128xf32>
    %c2_53 = arith.constant 2 : index
    %c0_54 = arith.constant 0 : index
    %c0_55 = arith.constant 0 : index
    %103 = vector.load %arg6[%c2_53, %c0_54, %c0_55] : memref<4x2x128xf32, #tpu.memory_space<vmem>>, vector<1x2x128xf32>
    %104 = vector.shape_cast %103 : vector<1x2x128xf32> to vector<2x128xf32>
    %105 = vector.shape_cast %102 : vector<2x128xf32> to vector<1x2x128xf32>
    tpu.vector_store %arg6[%c2_53, %c0_54, %c0_55], %105 {strides = array<i32>} : memref<4x2x128xf32, #tpu.memory_space<vmem>>, vector<1x2x128xf32>,
    %c2_56 = arith.constant 2 : index
    %c0_57 = arith.constant 0 : index
    %c0_58 = arith.constant 0 : index
    %106 = vector.load %arg7[%c2_56, %c0_57, %c0_58] : memref<4x2x128xf32, #tpu.memory_space<vmem>>, vector<1x2x128xf32>
    %107 = vector.shape_cast %106 : vector<1x2x128xf32> to vector<2x128xf32>
    %108 = arith.addf %107, %70 : vector<2x128xf32>
    %c2_59 = arith.constant 2 : index
    %c0_60 = arith.constant 0 : index
    %c0_61 = arith.constant 0 : index
    %109 = vector.load %arg7[%c2_59, %c0_60, %c0_61] : memref<4x2x128xf32, #tpu.memory_space<vmem>>, vector<1x2x128xf32>
    %110 = vector.shape_cast %109 : vector<1x2x128xf32> to vector<2x128xf32>
    %111 = vector.shape_cast %108 : vector<2x128xf32> to vector<1x2x128xf32>
    tpu.vector_store %arg7[%c2_59, %c0_60, %c0_61], %111 {strides = array<i32>} : memref<4x2x128xf32, #tpu.memory_space<vmem>>, vector<1x2x128xf32>,
    %c3_62 = arith.constant 3 : index
    %c0_63 = arith.constant 0 : index
    %c0_64 = arith.constant 0 : index
    %112 = vector.load %arg6[%c3_62, %c0_63, %c0_64] : memref<4x2x128xf32, #tpu.memory_space<vmem>>, vector<1x2x128xf32>
    %113 = vector.shape_cast %112 : vector<1x2x128xf32> to vector<2x128xf32>
    %114 = arith.addf %113, %73 : vector<2x128xf32>
    %c3_65 = arith.constant 3 : index
    %c0_66 = arith.constant 0 : index
    %c0_67 = arith.constant 0 : index
    %115 = vector.load %arg6[%c3_65, %c0_66, %c0_67] : memref<4x2x128xf32, #tpu.memory_space<vmem>>, vector<1x2x128xf32>
    %116 = vector.shape_cast %115 : vector<1x2x128xf32> to vector<2x128xf32>
    %117 = vector.shape_cast %114 : vector<2x128xf32> to vector<1x2x128xf32>
    tpu.vector_store %arg6[%c3_65, %c0_66, %c0_67], %117 {strides = array<i32>} : memref<4x2x128xf32, #tpu.memory_space<vmem>>, vector<1x2x128xf32>,
    %c3_68 = arith.constant 3 : index
    %c0_69 = arith.constant 0 : index
    %c0_70 = arith.constant 0 : index
    %118 = vector.load %arg7[%c3_68, %c0_69, %c0_70] : memref<4x2x128xf32, #tpu.memory_space<vmem>>, vector<1x2x128xf32>
    %119 = vector.shape_cast %118 : vector<1x2x128xf32> to vector<2x128xf32>
    %120 = arith.addf %119, %75 : vector<2x128xf32>
    %c3_71 = arith.constant 3 : index
    %c0_72 = arith.constant 0 : index
    %c0_73 = arith.constant 0 : index
    %121 = vector.load %arg7[%c3_71, %c0_72, %c0_73] : memref<4x2x128xf32, #tpu.memory_space<vmem>>, vector<1x2x128xf32>
    %122 = vector.shape_cast %121 : vector<1x2x128xf32> to vector<2x128xf32>
    %123 = vector.shape_cast %120 : vector<2x128xf32> to vector<1x2x128xf32>
    tpu.vector_store %arg7[%c3_71, %c0_72, %c0_73], %123 {strides = array<i32>} : memref<4x2x128xf32, #tpu.memory_space<vmem>>, vector<1x2x128xf32>,
    %c0_i32_74 = arith.constant 0 : i32
    %124 = arith.cmpi eq, %arg2, %c0_i32_74 : i32
    %125 = arith.extui %124 : i1 to i32
    %c0_i32_75 = arith.constant 0 : i32
    %126 = arith.cmpi ne, %125, %c0_i32_75 : i32
    scf.if %126 {
      %127 = tpu.iota {dimensions = array<i32: 1>} : vector<1x128xi32>
      %cst_76 = arith.constant 0.000000e+00 : f32
      %128 = vector.broadcast %cst_76 : f32 to vector<1x128xf32>
      %cst_77 = arith.constant 0.000000e+00 : f32
      %129 = vector.broadcast %cst_77 : f32 to vector<1x128xf32>
      %c0_i32_78 = arith.constant 0 : i32
      %130 = vector.broadcast %c0_i32_78 : i32 to vector<1x128xi32>
      %131 = arith.cmpi eq, %127, %130 : vector<1x128xi32>
      %c0_79 = arith.constant 0 : index
      %c0_80 = arith.constant 0 : index
      %c0_81 = arith.constant 0 : index
      %132 = vector.load %arg6[%c0_79, %c0_80, %c0_81] : memref<4x2x128xf32, #tpu.memory_space<vmem>>, vector<1x2x128xf32>
      %133 = vector.shape_cast %132 : vector<1x2x128xf32> to vector<2x128xf32>
      %134 = vector.shape_cast %133 : vector<2x128xf32> to vector<1x2x128xf32>
      %cst_82 = arith.constant dense<0.000000e+00> : vector<1xf32>
      %135 = vector.multi_reduction <add>, %134, %cst_82 [1, 2] : vector<1x2x128xf32> to vector<1xf32>
      %136 = vector.shape_cast %135 : vector<1xf32> to vector<1x1x1xf32>
      %137 = vector.extract %136[0, 0, 0] : f32 from vector<1x1x1xf32>
      %138 = vector.broadcast %137 : f32 to vector<1x128xf32>
      %139 = arith.select %131, %138, %128 : vector<1x128xi1>, vector<1x128xf32>
      %c0_i32_83 = arith.constant 0 : i32
      %140 = vector.broadcast %c0_i32_83 : i32 to vector<1x128xi32>
      %141 = arith.cmpi eq, %127, %140 : vector<1x128xi32>
      %c0_84 = arith.constant 0 : index
      %c0_85 = arith.constant 0 : index
      %c0_86 = arith.constant 0 : index
      %142 = vector.load %arg7[%c0_84, %c0_85, %c0_86] : memref<4x2x128xf32, #tpu.memory_space<vmem>>, vector<1x2x128xf32>
      %143 = vector.shape_cast %142 : vector<1x2x128xf32> to vector<2x128xf32>
      %144 = vector.shape_cast %143 : vector<2x128xf32> to vector<1x2x128xf32>
      %cst_87 = arith.constant dense<0.000000e+00> : vector<1xf32>
      %145 = vector.multi_reduction <add>, %144, %cst_87 [1, 2] : vector<1x2x128xf32> to vector<1xf32>
      %146 = vector.shape_cast %145 : vector<1xf32> to vector<1x1x1xf32>
      %147 = vector.extract %146[0, 0, 0] : f32 from vector<1x1x1xf32>
      %148 = vector.broadcast %147 : f32 to vector<1x128xf32>
      %149 = arith.select %141, %148, %129 : vector<1x128xi1>, vector<1x128xf32>
      %c1_i32_88 = arith.constant 1 : i32
      %150 = vector.broadcast %c1_i32_88 : i32 to vector<1x128xi32>
      %151 = arith.cmpi eq, %127, %150 : vector<1x128xi32>
      %c1_89 = arith.constant 1 : index
      %c0_90 = arith.constant 0 : index
      %c0_91 = arith.constant 0 : index
      %152 = vector.load %arg6[%c1_89, %c0_90, %c0_91] : memref<4x2x128xf32, #tpu.memory_space<vmem>>, vector<1x2x128xf32>
      %153 = vector.shape_cast %152 : vector<1x2x128xf32> to vector<2x128xf32>
      %154 = vector.shape_cast %153 : vector<2x128xf32> to vector<1x2x128xf32>
      %cst_92 = arith.constant dense<0.000000e+00> : vector<1xf32>
      %155 = vector.multi_reduction <add>, %154, %cst_92 [1, 2] : vector<1x2x128xf32> to vector<1xf32>
      %156 = vector.shape_cast %155 : vector<1xf32> to vector<1x1x1xf32>
      %157 = vector.extract %156[0, 0, 0] : f32 from vector<1x1x1xf32>
      %158 = vector.broadcast %157 : f32 to vector<1x128xf32>
      %159 = arith.select %151, %158, %139 : vector<1x128xi1>, vector<1x128xf32>
      %c1_i32_93 = arith.constant 1 : i32
      %160 = vector.broadcast %c1_i32_93 : i32 to vector<1x128xi32>
      %161 = arith.cmpi eq, %127, %160 : vector<1x128xi32>
      %c1_94 = arith.constant 1 : index
      %c0_95 = arith.constant 0 : index
      %c0_96 = arith.constant 0 : index
      %162 = vector.load %arg7[%c1_94, %c0_95, %c0_96] : memref<4x2x128xf32, #tpu.memory_space<vmem>>, vector<1x2x128xf32>
      %163 = vector.shape_cast %162 : vector<1x2x128xf32> to vector<2x128xf32>
      %164 = vector.shape_cast %163 : vector<2x128xf32> to vector<1x2x128xf32>
      %cst_97 = arith.constant dense<0.000000e+00> : vector<1xf32>
      %165 = vector.multi_reduction <add>, %164, %cst_97 [1, 2] : vector<1x2x128xf32> to vector<1xf32>
      %166 = vector.shape_cast %165 : vector<1xf32> to vector<1x1x1xf32>
      %167 = vector.extract %166[0, 0, 0] : f32 from vector<1x1x1xf32>
      %168 = vector.broadcast %167 : f32 to vector<1x128xf32>
      %169 = arith.select %161, %168, %149 : vector<1x128xi1>, vector<1x128xf32>
      %c2_i32_98 = arith.constant 2 : i32
      %170 = vector.broadcast %c2_i32_98 : i32 to vector<1x128xi32>
      %171 = arith.cmpi eq, %127, %170 : vector<1x128xi32>
      %c2_99 = arith.constant 2 : index
      %c0_100 = arith.constant 0 : index
      %c0_101 = arith.constant 0 : index
      %172 = vector.load %arg6[%c2_99, %c0_100, %c0_101] : memref<4x2x128xf32, #tpu.memory_space<vmem>>, vector<1x2x128xf32>
      %173 = vector.shape_cast %172 : vector<1x2x128xf32> to vector<2x128xf32>
      %174 = vector.shape_cast %173 : vector<2x128xf32> to vector<1x2x128xf32>
      %cst_102 = arith.constant dense<0.000000e+00> : vector<1xf32>
      %175 = vector.multi_reduction <add>, %174, %cst_102 [1, 2] : vector<1x2x128xf32> to vector<1xf32>
      %176 = vector.shape_cast %175 : vector<1xf32> to vector<1x1x1xf32>
      %177 = vector.extract %176[0, 0, 0] : f32 from vector<1x1x1xf32>
      %178 = vector.broadcast %177 : f32 to vector<1x128xf32>
      %179 = arith.select %171, %178, %159 : vector<1x128xi1>, vector<1x128xf32>
      %c2_i32_103 = arith.constant 2 : i32
      %180 = vector.broadcast %c2_i32_103 : i32 to vector<1x128xi32>
      %181 = arith.cmpi eq, %127, %180 : vector<1x128xi32>
      %c2_104 = arith.constant 2 : index
      %c0_105 = arith.constant 0 : index
      %c0_106 = arith.constant 0 : index
      %182 = vector.load %arg7[%c2_104, %c0_105, %c0_106] : memref<4x2x128xf32, #tpu.memory_space<vmem>>, vector<1x2x128xf32>
      %183 = vector.shape_cast %182 : vector<1x2x128xf32> to vector<2x128xf32>
      %184 = vector.shape_cast %183 : vector<2x128xf32> to vector<1x2x128xf32>
      %cst_107 = arith.constant dense<0.000000e+00> : vector<1xf32>
      %185 = vector.multi_reduction <add>, %184, %cst_107 [1, 2] : vector<1x2x128xf32> to vector<1xf32>
      %186 = vector.shape_cast %185 : vector<1xf32> to vector<1x1x1xf32>
      %187 = vector.extract %186[0, 0, 0] : f32 from vector<1x1x1xf32>
      %188 = vector.broadcast %187 : f32 to vector<1x128xf32>
      %189 = arith.select %181, %188, %169 : vector<1x128xi1>, vector<1x128xf32>
      %c3_i32 = arith.constant 3 : i32
      %190 = vector.broadcast %c3_i32 : i32 to vector<1x128xi32>
      %191 = arith.cmpi eq, %127, %190 : vector<1x128xi32>
      %c3_108 = arith.constant 3 : index
      %c0_109 = arith.constant 0 : index
      %c0_110 = arith.constant 0 : index
      %192 = vector.load %arg6[%c3_108, %c0_109, %c0_110] : memref<4x2x128xf32, #tpu.memory_space<vmem>>, vector<1x2x128xf32>
      %193 = vector.shape_cast %192 : vector<1x2x128xf32> to vector<2x128xf32>
      %194 = vector.shape_cast %193 : vector<2x128xf32> to vector<1x2x128xf32>
      %cst_111 = arith.constant dense<0.000000e+00> : vector<1xf32>
      %195 = vector.multi_reduction <add>, %194, %cst_111 [1, 2] : vector<1x2x128xf32> to vector<1xf32>
      %196 = vector.shape_cast %195 : vector<1xf32> to vector<1x1x1xf32>
      %197 = vector.extract %196[0, 0, 0] : f32 from vector<1x1x1xf32>
      %198 = vector.broadcast %197 : f32 to vector<1x128xf32>
      %199 = arith.select %191, %198, %179 : vector<1x128xi1>, vector<1x128xf32>
      %c3_i32_112 = arith.constant 3 : i32
      %200 = vector.broadcast %c3_i32_112 : i32 to vector<1x128xi32>
      %201 = arith.cmpi eq, %127, %200 : vector<1x128xi32>
      %c3_113 = arith.constant 3 : index
      %c0_114 = arith.constant 0 : index
      %c0_115 = arith.constant 0 : index
      %202 = vector.load %arg7[%c3_113, %c0_114, %c0_115] : memref<4x2x128xf32, #tpu.memory_space<vmem>>, vector<1x2x128xf32>
      %203 = vector.shape_cast %202 : vector<1x2x128xf32> to vector<2x128xf32>
      %204 = vector.shape_cast %203 : vector<2x128xf32> to vector<1x2x128xf32>
      %cst_116 = arith.constant dense<0.000000e+00> : vector<1xf32>
      %205 = vector.multi_reduction <add>, %204, %cst_116 [1, 2] : vector<1x2x128xf32> to vector<1xf32>
      %206 = vector.shape_cast %205 : vector<1xf32> to vector<1x1x1xf32>
      %207 = vector.extract %206[0, 0, 0] : f32 from vector<1x1x1xf32>
      %208 = vector.broadcast %207 : f32 to vector<1x128xf32>
      %209 = arith.select %201, %208, %189 : vector<1x128xi1>, vector<1x128xf32>
      %210 = tpu.iota {dimensions = array<i32: 0>} : vector<8x128xi32>
      %c0_i32_117 = arith.constant 0 : i32
      %211 = vector.broadcast %c0_i32_117 : i32 to vector<8x128xi32>
      %212 = arith.cmpi eq, %210, %211 : vector<8x128xi32>
      %c1_i32_118 = arith.constant 1 : i32
      %213 = vector.broadcast %c1_i32_118 : i32 to vector<8x128xi32>
      %214 = arith.cmpi eq, %210, %213 : vector<8x128xi32>
      %cst_119 = arith.constant 0.000000e+00 : f32
      %215 = vector.shape_cast %209 : vector<1x128xf32> to vector<1x128xf32>
      %216 = vector.broadcast %215 : vector<1x128xf32> to vector<8x128xf32>
      %217 = vector.broadcast %cst_119 : f32 to vector<8x128xf32>
      %218 = arith.select %214, %216, %217 : vector<8x128xi1>, vector<8x128xf32>
      %219 = vector.shape_cast %199 : vector<1x128xf32> to vector<1x128xf32>
      %220 = vector.broadcast %219 : vector<1x128xf32> to vector<8x128xf32>
      %221 = arith.select %212, %220, %218 : vector<8x128xi1>, vector<8x128xf32>
      %c0_120 = arith.constant 0 : index
      %c0_121 = arith.constant 0 : index
      %c0_122 = arith.constant 0 : index
      %c0_123 = arith.constant 0 : index
      %222 = vector.load %arg5[%c0_120, %c0_121, %c0_122, %c0_123] : memref<1x1x8x128xf32, #tpu.memory_space<vmem>>, vector<1x1x8x128xf32>
      %223 = vector.shape_cast %222 : vector<1x1x8x128xf32> to vector<8x128xf32>
      %224 = vector.shape_cast %221 : vector<8x128xf32> to vector<1x1x8x128xf32>
      tpu.vector_store %arg5[%c0_120, %c0_121, %c0_122, %c0_123], %224 {strides = array<i32>} : memref<1x1x8x128xf32, #tpu.memory_space<vmem>>, vector<1x1x8x128xf32>,
    } else {
    }
    return
  }
  func.func @transform_0(%arg0: i32, %arg1: i32, %arg2: i32) -> (i32, i32, i32, i32) {
    %c1_i32 = arith.constant 1 : i32
    %0 = arith.muli %arg0, %c1_i32 : i32
    %1 = arith.addi %0, %arg2 : i32
    %c0_i32 = arith.constant 0 : i32
    %c0_i32_0 = arith.constant 0 : i32
    %c0_i32_1 = arith.constant 0 : i32
    return %arg1, %c0_i32, %1, %c0_i32_0 : i32, i32, i32, i32
  }
  func.func @transform_1(%arg0: i32, %arg1: i32, %arg2: i32) -> (i32, i32, i32, i32) {
    %c1_i32 = arith.constant 1 : i32
    %0 = arith.muli %arg0, %c1_i32 : i32
    %1 = arith.addi %0, %arg2 : i32
    %c0_i32 = arith.constant 0 : i32
    %c0_i32_0 = arith.constant 0 : i32
    %c0_i32_1 = arith.constant 0 : i32
    return %arg1, %c0_i32, %1, %c0_i32_0 : i32, i32, i32, i32
  }
  func.func @transform_2(%arg0: i32, %arg1: i32, %arg2: i32) -> (i32, i32, i32, i32) {
    %c0_i32 = arith.constant 0 : i32
    %c0_i32_0 = arith.constant 0 : i32
    %c0_i32_1 = arith.constant 0 : i32
    return %arg0, %arg1, %c0_i32, %c0_i32_0 : i32, i32, i32, i32
  }
}

</mosaic_0001>

<llo_original>
// kernel: tpu_custom_call.1
$region0: #{tpu_custom_call.1}
  #allocation0 [shape = 'u32[]', space=smem, size = 0x4, offset = 0x4, fixed_abs, tag = 'smem constant byte address 0x4 - core index']
  #allocation1 [shape = 'u32[144,128]{1,0:T(1,128)}', space=vmem, size = 0x12000, scoped, tag = 'internal scratch']
  #allocation2 [shape = 'f32[4,2,128]{2,1,0:T(2,128)}', space=vmem, size = 0x1000, scoped, tag = 'scratch operand']
  #allocation3 [shape = 'f32[4,2,128]{2,1,0:T(2,128)}', space=vmem, size = 0x1000, scoped, tag = 'scratch operand']
  %s0 = inlined_call_operand.hbm [shape: f32[2,4,2,128], index: 0, kind: input, shape index: {}]
  %s1 = inlined_call_operand.hbm [shape: bf16[2,4,2,128], index: 1, kind: input, shape index: {}]
  %s2 = inlined_call_operand.hbm [shape: f32[1,2,8,128], index: 2, kind: output, shape index: {}]
  %s3 = sld [smem:[#allocation0]]
  $region57: #{tpu_custom_call.1} parent=0
    _
  %s5 = ssub.s32 1, %s3
  %s6 = scalar_select 0, %s5, %s3
  $region1: #{tpu_custom_call.1} parent=0
    #allocation4 [shape = 'u8[8192]{0}', space=vmem, size = 0x2000, scoped, tag = 'input window, operand 0']
    #allocation5 [shape = 's32[2]{0}', space=sflag, size = 0x8, scoped, tag = 'scoped memory for tpu_custom_call.1']
    #allocation6 [shape = 's32[2]{0}', space=sflag, size = 0x8, scoped, tag = 'scoped memory for tpu_custom_call.1']
    #allocation7 [shape = 'u8[4096]{0}', space=vmem, size = 0x1000, scoped, tag = 'input window, operand 1']
    #allocation8 [shape = 's32[2]{0}', space=sflag, size = 0x8, scoped, tag = 'scoped memory for tpu_custom_call.1']
    #allocation9 [shape = 'u8[8192]{0}', space=vmem, size = 0x2000, scoped, tag = 'output window, operand 0']
    %7 = vsyncpa [#allocation5], 0
    %s8 = scalar_lea.sflag [#allocation5], 1
    %9 = vsyncpa %s8, 0
    %10 = vsyncpa [#allocation8], 0
    %s11 = scalar_lea.sflag [#allocation8], 1
    %12 = vsyncpa %s11, 0
    %13 = vsyncpa [#allocation6], 0
    %s14 = scalar_lea.sflag [#allocation6], 1
    %15 = vsyncpa %s14, 0
    loop: start=0, step=1, limit=4
    $region2: #{tpu_custom_call.1} parent=1 // loop_pre_header
      _
    $region3: #{tpu_custom_call.1} parent=1 // loop_header
      %s17 = sphi 0, %s21
      %p18 = scmp.ge.s32.totalorder %s17, 4
      %s24 = sphi 0, %s43
      %s25 = sphi 0, %s39
      %s26 = sphi 0, %s35
      %s27 = sphi 0, %s24
      %s28 = sphi 0, %s25
      %s29 = sphi 0, %s26
      %s30 = sphi 0, %s27
      %s31 = sphi 0, %s28
      %s32 = sphi 0, %s29
      %s50 = sphi 0, %s52
      %s53 = sphi 0, %s50
      %s54 = sphi 0, %s53
      %s70 = sphi 0, %s54
      %s80 = sphi 0, %s82
      %s83 = sphi 0, %s80
      %s84 = sphi 0, %s83
      %s100 = sphi 0, %s84
      %s108 = sphi 0, %s110
      %s111 = sphi 0, %s108
      %s112 = sphi 0, %s111
      %s128 = sphi 0, %s112
    $region4: #{tpu_custom_call.1} parent=1 // loop_header_branch
      %20 = sbr.rel (%p18) target = $region8
    $region5: #{tpu_custom_call.1} parent=1 // loop_body
      %s22 = ssub.s32 %s17, 1
      %s23 = ssub.s32 %s17, 2
      %s33 = sadd.s32 1, %s26
      %p34 = scmp.ge.s32.totalorder %s33, 1
      %s35 = scalar_select %p34, 0, %s33
      %s36 = sadd.s32 1, %s25
      %s37 = scalar_select %p34, %s36, %s25
      %p38 = scmp.ge.s32.totalorder %s37, 2
      %s39 = scalar_select %p38, 0, %s37
      %s40 = sadd.s32 1, %s24
      %s41 = scalar_select %p38, %s40, %s24
      %p42 = scmp.ge.s32.totalorder %s41, 1
      %s43 = scalar_select %p42, 0, %s41
      %s44 = sadd.s32 %s24, %s26
      %s45 = sadd.s32 %s43, %s35
      %s46 = ssub.s32 %s25, %s39
      %s47 = ssub.s32 %s44, %s45
      %s48 = sor.u32 %s46, %s47
      %p49 = scmp.eq.s32.totalorder %s48, 0
      %s51 = sadd.s32 %s50, 1
      %s52 = scalar_select %p49, %s50, %s51
      %p55 = pneg %p49
      %p56 = scmp.eq.s32.totalorder %s17, 1
      %p57 = por %p55, %p56
      %p58 = scmp.ne.s32.totalorder %s50, %s53
      %p59 = scmp.eq.s32.totalorder %s17, 0
      %p60 = por %p58, %p59
      %p61 = scmp.ne.s32.totalorder %s50, %s53
      %p62 = scmp.eq.s32.totalorder %s22, 1
      %p63 = por %p61, %p62
      %p64 = scmp.ne.s32.totalorder %s53, %s54
      %p65 = scmp.eq.s32.totalorder %s22, 0
      %p66 = por %p64, %p65
      %p67 = scmp.ne.s32.totalorder %s53, %s54
      %p68 = scmp.eq.s32.totalorder %s23, 1
      %p69 = por %p67, %p68
      %p71 = scmp.ne.s32.totalorder %s54, %s70
      %p72 = scmp.eq.s32.totalorder %s23, 0
      %p73 = por %p71, %p72
      %s74 = sadd.s32 %s24, %s26
      %s75 = sadd.s32 %s43, %s35
      %s76 = ssub.s32 %s25, %s39
      %s77 = ssub.s32 %s74, %s75
      %s78 = sor.u32 %s76, %s77
      %p79 = scmp.eq.s32.totalorder %s78, 0
      %s81 = sadd.s32 %s80, 1
      %s82 = scalar_select %p79, %s80, %s81
      %p85 = pneg %p79
      %p86 = scmp.eq.s32.totalorder %s17, 1
      %p87 = por %p85, %p86
      %p88 = scmp.ne.s32.totalorder %s80, %s83
      %p89 = scmp.eq.s32.totalorder %s17, 0
      %p90 = por %p88, %p89
      %p91 = scmp.ne.s32.totalorder %s80, %s83
      %p92 = scmp.eq.s32.totalorder %s22, 1
      %p93 = por %p91, %p92
      %p94 = scmp.ne.s32.totalorder %s83, %s84
      %p95 = scmp.eq.s32.totalorder %s22, 0
      %p96 = por %p94, %p95
      %p97 = scmp.ne.s32.totalorder %s83, %s84
      %p98 = scmp.eq.s32.totalorder %s23, 1
      %p99 = por %p97, %p98
      %p101 = scmp.ne.s32.totalorder %s84, %s100
      %p102 = scmp.eq.s32.totalorder %s23, 0
      %p103 = por %p101, %p102
      %s104 = ssub.s32 %s24, %s43
      %s105 = ssub.s32 %s25, %s39
      %s106 = sor.u32 %s104, %s105
      %p107 = scmp.eq.s32.totalorder %s106, 0
      %s109 = sadd.s32 %s108, 1
      %s110 = scalar_select %p107, %s108, %s109
      %p113 = pneg %p107
      %p114 = scmp.eq.s32.totalorder %s17, 1
      %p115 = por %p113, %p114
      %p116 = scmp.ne.s32.totalorder %s108, %s111
      %p117 = scmp.eq.s32.totalorder %s17, 0
      %p118 = por %p116, %p117
      %p119 = scmp.ne.s32.totalorder %s108, %s111
      %p120 = scmp.eq.s32.totalorder %s22, 1
      %p121 = por %p119, %p120
      %p122 = scmp.ne.s32.totalorder %s111, %s112
      %p123 = scmp.eq.s32.totalorder %s22, 0
      %p124 = por %p122, %p123
      %p125 = scmp.ne.s32.totalorder %s111, %s112
      %p126 = scmp.eq.s32.totalorder %s23, 1
      %p127 = por %p125, %p126
      %p129 = scmp.ne.s32.totalorder %s112, %s128
      %p130 = scmp.eq.s32.totalorder %s23, 0
      %p131 = por %p129, %p130
      %p132 = scmp.le.s32.totalorder 1, %s17
      %p133 = scmp.lt.s32.totalorder %s17, 3
      %p134 = pnand %p132, %p133
      %p135 = pneg %p134
      // Predicated region
      $region9: #{tpu_custom_call.1} parent=5 // pred_check
        _
      $region10: #{tpu_custom_call.1} parent=5 // pred_check_branch
        %137 = sbr.rel (%p134) target = $region12
      $region11: #{tpu_custom_call.1} parent=5 // pred_region
        %s138 = ssub.s32 %s17, 1
      $region12: #{tpu_custom_call.1} parent=5 // pred_fallthru
        _
      %p139 = scmp.lt.s32.totalorder %s17, 2
      // Predicated region
      $region13: #{tpu_custom_call.1} parent=5 // pred_check
        %p140 = pneg %p139
      $region14: #{tpu_custom_call.1} parent=5 // pred_check_branch
        %142 = sbr.rel (%p140) target = $region16
      $region15: #{tpu_custom_call.1} parent=5 // pred_region
        // Predicated region
        $region17: #{tpu_custom_call.1} parent=15 // pred_check
          %p143 = pneg %p60
        $region18: #{tpu_custom_call.1} parent=15 // pred_check_branch
          %145 = sbr.rel (%p143) target = $region20
        $region19: #{tpu_custom_call.1} parent=15 // pred_region
          %s146 = sand.u32 %s50, 1
          %s147 = scalar_lea.sflag [#allocation5], %s146
          %s148 = sand.u32 %s50, 1
          %s149 = smul.addr %s148, 8
          %s150 = scalar_lea.vmem [#allocation4], %s149
          %s151 = sadd.s32 %s24, %s26
          %s153 = ssub.s32 128, 128
          %154 = vsyncadd %s147, %s153
          %s155 = smul.addr %s25, 4
          %s156 = sadd.s32 %s151, %s155
          %s157 = smul.addr %s156, 32
          %s158 = scalar_lea.hbm %s0, %s157
          %s159 = sshll.u32 %s150, 4
          %s160 = int_to_ptr.vmem [resolvable:$true] %s159
          %165 = dma.hbm_to_vmem [thread:$0]  %s158, 128, %s160, %s147, 32, 32, 2
        $region20: #{tpu_custom_call.1} parent=15 // pred_fallthru
          _
        // Predicated region
        $region21: #{tpu_custom_call.1} parent=15 // pred_check
          %p166 = pneg %p90
        $region22: #{tpu_custom_call.1} parent=15 // pred_check_branch
          %168 = sbr.rel (%p166) target = $region24
        $region23: #{tpu_custom_call.1} parent=15 // pred_region
          %s169 = sand.u32 %s80, 1
          %s170 = scalar_lea.sflag [#allocation8], %s169
          %s171 = sand.u32 %s80, 1
          %s172 = smul.addr %s171, 4
          %s173 = scalar_lea.vmem [#allocation7], %s172
          %s174 = sadd.s32 %s24, %s26
          %s176 = ssub.s32 64, 64
          %177 = vsyncadd %s170, %s176
          %s178 = smul.addr %s25, 4
          %s179 = sadd.s32 %s174, %s178
          %s180 = smul.addr %s179, 16
          %s181 = scalar_lea.hbm %s1, %s180
          %s182 = sshll.u32 %s173, 4
          %s183 = int_to_ptr.vmem [resolvable:$true] %s182
          %188 = dma.hbm_to_vmem [thread:$0]  %s181, 64, %s183, %s170, 16, 16, 1
        $region24: #{tpu_custom_call.1} parent=15 // pred_fallthru
          _
      $region16: #{tpu_custom_call.1} parent=5 // pred_fallthru
        _
      %p189 = scmp.le.s32.totalorder 1, %s17
      %p190 = scmp.lt.s32.totalorder %s17, 3
      %p191 = pnand %p189, %p190
      %p192 = pneg %p191
      // Predicated region
      $region25: #{tpu_custom_call.1} parent=5 // pred_check
        _
      $region26: #{tpu_custom_call.1} parent=5 // pred_check_branch
        %194 = sbr.rel (%p191) target = $region28
      $region27: #{tpu_custom_call.1} parent=5 // pred_region
        %s195 = ssub.s32 %s17, 1
        %s196 = sand.u32 %s53, 1
        %s197 = scalar_lea.sflag [#allocation5], %s196
        %s198 = sand.u32 %s53, 1
        %s199 = smul.addr %s198, 8
        %s200 = scalar_lea.vmem [#allocation4], %s199
        // Predicated region
        $region29: #{tpu_custom_call.1} parent=27 // pred_check
          %p201 = pneg %p66
        $region30: #{tpu_custom_call.1} parent=27 // pred_check_branch
          %203 = sbr.rel (%p201) target = $region32
        $region31: #{tpu_custom_call.1} parent=27 // pred_region
          %204 = dma.done %s197, 128
        $region32: #{tpu_custom_call.1} parent=27 // pred_fallthru
          _
        %s205 = sand.u32 %s83, 1
        %s206 = scalar_lea.sflag [#allocation8], %s205
        %s207 = sand.u32 %s83, 1
        %s208 = smul.addr %s207, 4
        %s209 = scalar_lea.vmem [#allocation7], %s208
        // Predicated region
        $region33: #{tpu_custom_call.1} parent=27 // pred_check
          %p210 = pneg %p96
        $region34: #{tpu_custom_call.1} parent=27 // pred_check_branch
          %212 = sbr.rel (%p210) target = $region36
        $region35: #{tpu_custom_call.1} parent=27 // pred_region
          %213 = dma.done %s206, 64
        $region36: #{tpu_custom_call.1} parent=27 // pred_fallthru
          _
        %s214 = sand.u32 %s53, 1
        %s215 = scalar_lea.sflag [#allocation5], %s214
        %s216 = sand.u32 %s53, 1
        %s217 = smul.addr %s216, 8
        %s218 = scalar_lea.vmem [#allocation4], %s217
        %p219 = pneg %p66
        %p220 = pneg %p63
        %s221 = sand.u32 %s83, 1
        %s222 = scalar_lea.sflag [#allocation8], %s221
        %s223 = sand.u32 %s83, 1
        %s224 = smul.addr %s223, 4
        %s225 = scalar_lea.vmem [#allocation7], %s224
        %p226 = pneg %p96
        %p227 = pneg %p93
        %p228 = pneg %p124
        %p229 = pneg %p121
        %s230 = sand.u32 %s111, 1
        %s231 = scalar_lea.sflag [#allocation6], %s230
        %s232 = sand.u32 %s111, 1
        %s233 = smul.addr %s232, 8
        %s234 = scalar_lea.vmem [#allocation9], %s233
        %s235 = sadd.s32 %s27, %s29
        %s236 = sadd.s32 %s27, %s29
        %p237 = scmp.eq.s32.totalorder %s29, 0
        // Predicated region
        $region37: #{tpu_custom_call.1} parent=27 // pred_check
          %p238 = pneg %p237
        $region38: #{tpu_custom_call.1} parent=27 // pred_check_branch
          %240 = sbr.rel (%p238) target = $region40
        $region39: #{tpu_custom_call.1} parent=27 // pred_region
          %241 = vst [vmem:[#allocation2] sm:$0x3] 0.0
          %242 = vst [vmem:[#allocation2 + $0x2] sm:$0x3] 0.0
          %243 = vst [vmem:[#allocation2 + $0x4] sm:$0x3] 0.0
          %244 = vst [vmem:[#allocation2 + $0x6] sm:$0x3] 0.0
          %245 = vst [vmem:[#allocation3] sm:$0x3] 0.0
          %246 = vst [vmem:[#allocation3 + $0x2] sm:$0x3] 0.0
          %247 = vst [vmem:[#allocation3 + $0x4] sm:$0x3] 0.0
          %248 = vst [vmem:[#allocation3 + $0x6] sm:$0x3] 0.0
        $region40: #{tpu_custom_call.1} parent=27 // pred_fallthru
          _
        %v249 = vld [vmem:[%s200] sm:$0x3]
        %s250 = sadd.s32 0, 2
        %s251 = scalar_lea.vmem %s200, %s250 [#allocation4]
        %v252 = vld [vmem:[%s251] sm:$0x3]
        %s253 = sadd.s32 0, 4
        %s254 = scalar_lea.vmem %s200, %s253 [#allocation4]
        %v255 = vld [vmem:[%s254] sm:$0x3]
        %s256 = sadd.s32 0, 6
        %s257 = scalar_lea.vmem %s200, %s256 [#allocation4]
        %v258 = vld [vmem:[%s257] sm:$0x3]
        %v259 = vmax.f32 %v249, %v252
        %v260 = vmax.f32 %v259, %v255
        %v261 = vmax.f32 %v260, %v258
        %v262 = vsub.f32 %v249, %v261
        %v263 = vmul.f32 %v262, 1.442695
        %v264 = vpow.pop %v263
        %v265 = vsub.f32 %v252, %v261
        %v266 = vmul.f32 %v265, 1.442695
        %v267 = vpow.pop %v266
        %v268 = vsub.f32 %v255, %v261
        %v269 = vmul.f32 %v268, 1.442695
        %v270 = vpow.pop %v269
        %v271 = vsub.f32 %v258, %v261
        %v272 = vmul.f32 %v271, 1.442695
        %v273 = vpow.pop %v272
        %v274 = vadd.f32 %v264, %v267
        %v275 = vadd.f32 %v274, %v270
        %v276 = vadd.f32 %v275, %v273
        %v277 = vrcp.pop %v276
        %v278 = vmul.f32 %v276, %v277
        %v279 = vsub.f32 2.0, %v278
        %v280 = vmul.f32 %v277, %v279
        %v281 = vld [vmem:[%s209] sm:$0x1]
        %v282 = vunpack.c.l.bf16 %v281
        %s283 = sadd.s32 0, 1
        %s284 = scalar_lea.vmem %s209, %s283 [#allocation7]
        %v285 = vld [vmem:[%s284] sm:$0x1]
        %v286 = vunpack.c.l.bf16 %v285
        %s287 = sadd.s32 0, 2
        %s288 = scalar_lea.vmem %s209, %s287 [#allocation7]
        %v289 = vld [vmem:[%s288] sm:$0x1]
        %v290 = vunpack.c.l.bf16 %v289
        %s291 = sadd.s32 0, 3
        %s292 = scalar_lea.vmem %s209, %s291 [#allocation7]
        %v293 = vld [vmem:[%s292] sm:$0x1]
        %v294 = vunpack.c.l.bf16 %v293
        %v295 = vmul.f32 %v264, %v280
        %v296 = vmul.f32 %v295, %v282
        %v297 = vadd.f32 %v296, 0.0
        %v298 = vadd.f32 %v295, 0.0
        %v299 = vadd.f32 %v298, %v282
        %v300 = vmul.f32 %v267, %v280
        %v301 = vmul.f32 %v300, %v286
        %v302 = vadd.f32 %v301, 0.0
        %v303 = vadd.f32 %v300, 0.0
        %v304 = vadd.f32 %v303, %v286
        %v305 = vmul.f32 %v270, %v280
        %v306 = vmul.f32 %v305, %v290
        %v307 = vadd.f32 %v306, 0.0
        %v308 = vadd.f32 %v305, 0.0
        %v309 = vadd.f32 %v308, %v290
        %v310 = vmul.f32 %v273, %v280
        %v311 = vmul.f32 %v310, %v294
        %v312 = vadd.f32 %v311, 0.0
        %v313 = vadd.f32 %v310, 0.0
        %v314 = vadd.f32 %v313, %v294
        %v315 = vld [vmem:[#allocation2] sm:$0x3]
        %v316 = vadd.f32 %v315, %v297
        %317 = vst [vmem:[#allocation2] sm:$0x3] %v316
        %v318 = vld [vmem:[#allocation3] sm:$0x3]
        %v319 = vadd.f32 %v318, %v299
        %320 = vst [vmem:[#allocation3] sm:$0x3] %v319
        %s321 = scalar_lea.vmem [#allocation2], 2
        %v322 = vld [vmem:[%s321] sm:$0x3]
        %v323 = vadd.f32 %v322, %v302
        %324 = vst [vmem:[%s321] sm:$0x3] %v323
        %s325 = scalar_lea.vmem [#allocation3], 2
        %v326 = vld [vmem:[%s325] sm:$0x3]
        %v327 = vadd.f32 %v326, %v304
        %328 = vst [vmem:[%s325] sm:$0x3] %v327
        %s329 = scalar_lea.vmem [#allocation2], 4
        %v330 = vld [vmem:[%s329] sm:$0x3]
        %v331 = vadd.f32 %v330, %v307
        %332 = vst [vmem:[%s329] sm:$0x3] %v331
        %s333 = scalar_lea.vmem [#allocation3], 4
        %v334 = vld [vmem:[%s333] sm:$0x3]
        %v335 = vadd.f32 %v334, %v309
        %336 = vst [vmem:[%s333] sm:$0x3] %v335
        %s337 = scalar_lea.vmem [#allocation2], 6
        %v338 = vld [vmem:[%s337] sm:$0x3]
        %v339 = vadd.f32 %v338, %v312
        %340 = vst [vmem:[%s337] sm:$0x3] %v339
        %s341 = scalar_lea.vmem [#allocation3], 6
        %v342 = vld [vmem:[%s341] sm:$0x3]
        %v343 = vadd.f32 %v342, %v314
        %344 = vst [vmem:[%s341] sm:$0x3] %v343
        // Predicated region
        $region41: #{tpu_custom_call.1} parent=27 // pred_check
          %p345 = pneg %p237
        $region42: #{tpu_custom_call.1} parent=27 // pred_check_branch
          %347 = sbr.rel (%p345) target = $region44
        $region43: #{tpu_custom_call.1} parent=27 // pred_region
          %v348 = vlaneseq
          %v349 = vand.u32 %v348, 127
          %vm350 = vcmp.eq.s32.totalorder %v349, 0
          %v351 = vld [vmem:[#allocation2] sm:$0x3]
          %vm352 = vcmask 1041408
          %v353 = vsel %vm352, %v351, 0.0
          %354 = vadd.xlane.f32.xlu0 %v353
          %v355 = vpop.xlane.xlu0 %354
          %v356 = vrot.slane %v355, 4
          %v357 = vadd.f32 %v355, %v356
          %v358 = vrot.slane %v357, 2
          %v359 = vadd.f32 %v357, %v358
          %v360 = vrot.slane %v359, 1
          %v361 = vadd.f32 %v359, %v360
          %s362 = vtos %v361
          %v363 = vstv %s362
          %v364 = vsel %vm350, %v363, 0.0
          %v365 = vld [vmem:[#allocation3] sm:$0x3]
          %v366 = vsel %vm352, %v365, 0.0
          %367 = vadd.xlane.f32.xlu0 %v366
          %v368 = vpop.xlane.xlu0 %367
          %v369 = vrot.slane %v368, 4
          %v370 = vadd.f32 %v368, %v369
          %v371 = vrot.slane %v370, 2
          %v372 = vadd.f32 %v370, %v371
          %v373 = vrot.slane %v372, 1
          %v374 = vadd.f32 %v372, %v373
          %s375 = vtos %v374
          %v376 = vstv %s375
          %v377 = vsel %vm350, %v376, 0.0
          %vm378 = vcmp.eq.s32.totalorder %v349, 1
          %v379 = vld [vmem:[%s321] sm:$0x3]
          %v380 = vsel %vm352, %v379, 0.0
          %381 = vadd.xlane.f32.xlu0 %v380
          %v382 = vpop.xlane.xlu0 %381
          %v383 = vrot.slane %v382, 4
          %v384 = vadd.f32 %v382, %v383
          %v385 = vrot.slane %v384, 2
          %v386 = vadd.f32 %v384, %v385
          %v387 = vrot.slane %v386, 1
          %v388 = vadd.f32 %v386, %v387
          %s389 = vtos %v388
          %v390 = vstv %s389
          %v391 = vsel %vm378, %v390, %v364
          %v392 = vld [vmem:[%s325] sm:$0x3]
          %v393 = vsel %vm352, %v392, 0.0
          %394 = vadd.xlane.f32.xlu0 %v393
          %v395 = vpop.xlane.xlu0 %394
          %v396 = vrot.slane %v395, 4
          %v397 = vadd.f32 %v395, %v396
          %v398 = vrot.slane %v397, 2
          %v399 = vadd.f32 %v397, %v398
          %v400 = vrot.slane %v399, 1
          %v401 = vadd.f32 %v399, %v400
          %s402 = vtos %v401
          %v403 = vstv %s402
          %v404 = vsel %vm378, %v403, %v377
          %vm405 = vcmp.eq.s32.totalorder %v349, 2
          %v406 = vld [vmem:[%s329] sm:$0x3]
          %v407 = vsel %vm352, %v406, 0.0
          %408 = vadd.xlane.f32.xlu0 %v407
          %v409 = vpop.xlane.xlu0 %408
          %v410 = vrot.slane %v409, 4
          %v411 = vadd.f32 %v409, %v410
          %v412 = vrot.slane %v411, 2
          %v413 = vadd.f32 %v411, %v412
          %v414 = vrot.slane %v413, 1
          %v415 = vadd.f32 %v413, %v414
          %s416 = vtos %v415
          %v417 = vstv %s416
          %v418 = vsel %vm405, %v417, %v391
          %v419 = vld [vmem:[%s333] sm:$0x3]
          %v420 = vsel %vm352, %v419, 0.0
          %421 = vadd.xlane.f32.xlu0 %v420
          %v422 = vpop.xlane.xlu0 %421
          %v423 = vrot.slane %v422, 4
          %v424 = vadd.f32 %v422, %v423
          %v425 = vrot.slane %v424, 2
          %v426 = vadd.f32 %v424, %v425
          %v427 = vrot.slane %v426, 1
          %v428 = vadd.f32 %v426, %v427
          %s429 = vtos %v428
          %v430 = vstv %s429
          %v431 = vsel %vm405, %v430, %v404
          %vm432 = vcmp.eq.s32.totalorder %v349, 3
          %v433 = vld [vmem:[%s337] sm:$0x3]
          %v434 = vsel %vm352, %v433, 0.0
          %435 = vadd.xlane.f32.xlu0 %v434
          %v436 = vpop.xlane.xlu0 %435
          %v437 = vrot.slane %v436, 4
          %v438 = vadd.f32 %v436, %v437
          %v439 = vrot.slane %v438, 2
          %v440 = vadd.f32 %v438, %v439
          %v441 = vrot.slane %v440, 1
          %v442 = vadd.f32 %v440, %v441
          %s443 = vtos %v442
          %v444 = vstv %s443
          %v445 = vsel %vm432, %v444, %v418
          %v446 = vld [vmem:[%s341] sm:$0x3]
          %v447 = vsel %vm352, %v446, 0.0
          %448 = vadd.xlane.f32.xlu0 %v447
          %v449 = vpop.xlane.xlu0 %448
          %v450 = vrot.slane %v449, 4
          %v451 = vadd.f32 %v449, %v450
          %v452 = vrot.slane %v451, 2
          %v453 = vadd.f32 %v451, %v452
          %v454 = vrot.slane %v453, 1
          %v455 = vadd.f32 %v453, %v454
          %s456 = vtos %v455
          %v457 = vstv %s456
          %v458 = vsel %vm432, %v457, %v431
          %v459 = vlaneseq
          %v460 = vshrl.u32 %v459, 7
          %vm461 = vcmp.eq.s32.totalorder %v460, 0
          %vm462 = vcmp.eq.s32.totalorder %v460, 1
          %v463 = vsel %vm462, %v458, 0.0
          %v464 = vsel %vm461, %v445, %v463
          %465 = vst [vmem:[%s234] sm:$0xff] %v464
        $region44: #{tpu_custom_call.1} parent=27 // pred_fallthru
          _
        %s466 = sand.u32 %s111, 1
        %s467 = scalar_lea.sflag [#allocation6], %s466
        %s468 = sand.u32 %s111, 1
        %s469 = smul.addr %s468, 8
        %s470 = scalar_lea.vmem [#allocation9], %s469
        // Predicated region
        $region45: #{tpu_custom_call.1} parent=27 // pred_check
          %p471 = pneg %p121
        $region46: #{tpu_custom_call.1} parent=27 // pred_check_branch
          %473 = sbr.rel (%p471) target = $region48
        $region47: #{tpu_custom_call.1} parent=27 // pred_region
          %s475 = ssub.s32 128, 128
          %476 = vsyncadd %s467, %s475
          %s477 = smul.addr %s27, 2
          %s478 = sadd.s32 %s28, %s477
          %s479 = smul.addr %s478, 128
          %s480 = scalar_lea.hbm %s2, %s479
          %s482 = sshll.u32 %s470, 4
          %s483 = int_to_ptr.vmem [resolvable:$true] %s482
          %485 = dma.vmem_to_hbm [thread:$0]  %s483, 128, %s480, %s467
        $region48: #{tpu_custom_call.1} parent=27 // pred_fallthru
          _
      $region28: #{tpu_custom_call.1} parent=5 // pred_fallthru
        _
      %p486 = scmp.le.s32.totalorder 2, %s17
      // Predicated region
      $region49: #{tpu_custom_call.1} parent=5 // pred_check
        %p487 = pneg %p486
      $region50: #{tpu_custom_call.1} parent=5 // pred_check_branch
        %489 = sbr.rel (%p487) target = $region52
      $region51: #{tpu_custom_call.1} parent=5 // pred_region
        %s490 = ssub.s32 %s17, 2
        // Predicated region
        $region53: #{tpu_custom_call.1} parent=51 // pred_check
          %p491 = pneg %p127
        $region54: #{tpu_custom_call.1} parent=51 // pred_check_branch
          %493 = sbr.rel (%p491) target = $region56
        $region55: #{tpu_custom_call.1} parent=51 // pred_region
          %s494 = sand.u32 %s112, 1
          %s495 = scalar_lea.sflag [#allocation6], %s494
          %s496 = sand.u32 %s112, 1
          %s497 = smul.addr %s496, 8
          %s498 = scalar_lea.vmem [#allocation9], %s497
          %499 = dma.done %s495, 128
        $region56: #{tpu_custom_call.1} parent=51 // pred_fallthru
          _
      $region52: #{tpu_custom_call.1} parent=5 // pred_fallthru
        _
    $region6: #{tpu_custom_call.1} parent=1 // loop_footer
      %s21 = sadd.s32 1, %s17
    $region7: #{tpu_custom_call.1} parent=1 // loop_footer_branch
      %16 = sbr.rel target = $region3
    $region8: #{tpu_custom_call.1} parent=1 // loop_exit
      _
    %500 = vsyncpa [#allocation5], 1
    %s501 = scalar_lea.sflag [#allocation5], 1
    %502 = vsyncpa %s501, 1
    %503 = vsyncpa [#allocation8], 1
    %s504 = scalar_lea.sflag [#allocation8], 1
    %505 = vsyncpa %s504, 1
    %506 = vsyncpa [#allocation6], 1
    %s507 = scalar_lea.sflag [#allocation6], 1
    %508 = vsyncpa %s507, 1

</llo_original>
